<compile_context>
chip_gen: v7x
topology: tpu7x:2x2x1
jax: 0.10.0
libtpu: 0.0.40
codegen_flags: <defaults>
</compile_context>

<pallas_src>
import functools

import jax
import jax.numpy as jnp
from jax.experimental import pallas as pl
from jax.experimental.pallas import tpu as pltpu

N_CHANNELS = 5
SIZE = 64
LANES = 128


def _water_kernel(x_ref, p_ref, out_ref, *, inv_hw):
    """Fused WaterPixelDetector forward.

    x_ref  : (C, HW//128, 128) f32 VMEM  -- input image, lane/sublane dense
    p_ref  : (2*C + 2,)        f32 SMEM  -- [wm(C), wd(C), bm, bd]
    out_ref: (HW//128, 128)    u8  VMEM  -- 0/1 prediction mask
    inv_hw : static 1/(H*W) from the wrapper (NOT derived from block shape)
    """
    c_dim = x_ref.shape[0]

    # --- single fused pass over channels: each x_ref[c] slab is loaded once
    # and feeds both accumulators (model logits + discriminator combine). ---
    x0 = x_ref[0]
    logits = x0 * p_ref[0]            # model:          sum_c x[c] * wm[c]
    disc = x0 * p_ref[c_dim]          # discriminator:  sum_c x[c] * wd[c]
    for c in range(1, c_dim):
        xc = x_ref[c]
        logits = logits + xc * p_ref[c]
        disc = disc + xc * p_ref[c_dim + c]
    logits = logits + p_ref[2 * c_dim]                       # + bm

    # --- discriminator: global-avg-pool -> linear, as one scalar reduce ---
    # sum_c mean(x[c]) * wd[c] == mean(sum_c x[c] * wd[c])
    wet_logit = jnp.sum(disc) * inv_hw + p_ref[2 * c_dim + 1]   # scalar, + bd

    # pred = (sigmoid(logits) > 0.5) if sigmoid(wet) > 0.5 else zeros
    #      = (logits > 0) & (wet_logit > 0)       (exactly equivalent)
    mask = jnp.logical_and(logits > 0.0, wet_logit > 0.0)     # (rows, 128)
    out_ref[...] = mask.astype(jnp.uint8)


def pack_params(wm, bm, wd, bd):
    """Pre-pack all tiny parameters into one (2C+2,) f32 array.

    Call ONCE at setup time (outside the jitted per-call path) so the concat
    and its 48 B HBM round trip never sit on the latency-critical path.
    """
    return jnp.concatenate([
        wm.reshape(-1), wd.reshape(-1), bm.reshape(-1), bd.reshape(-1),
    ]).astype(jnp.float32)


@functools.partial(jax.jit, static_argnames=("n_channels", "size"))
def water_pixel_detector(x_nchw, params, *, n_channels=N_CHANNELS, size=SIZE):
    """JAX wrapper reproducing WaterPixelDetector.forward (with discriminator)."""
    n, c, h, w = x_nchw.shape
    assert n == 1 and c == n_channels and h == size and w == size, "invalid shape"
    # f32 required: casting here would materialize a full extra HBM copy of
    # the image as a separate op before the kernel (dominant data movement).
    assert x_nchw.dtype == jnp.float32, "expected float32 input"
    assert params.shape == (2 * n_channels + 2,) and params.dtype == jnp.float32

    hw = h * w
    assert hw % LANES == 0, "spatial size must flatten to a multiple of 128"
    rows = hw // LANES

    # Lane/sublane-dense layout: NCHW (1,C,H,W) -> (C, HW//128, 128).
    # Contiguous reshape: metadata-only, no HBM copy.
    x = x_nchw.reshape(c, rows, LANES)

    kernel = functools.partial(_water_kernel, inv_hw=1.0 / float(hw))

    out = pl.pallas_call(
        kernel,
        out_shape=jax.ShapeDtypeStruct((rows, LANES), jnp.uint8),
        in_specs=[
            pl.BlockSpec(memory_space=pltpu.MemorySpace.VMEM),   # x (full block)
            pl.BlockSpec(memory_space=pltpu.MemorySpace.SMEM),   # packed params
        ],
        out_specs=pl.BlockSpec(memory_space=pltpu.MemorySpace.VMEM),
        cost_estimate=pl.CostEstimate(
            flops=4 * c * hw,                                    # 2 FMA chains
            transcendentals=0,
            bytes_accessed=c * hw * 4 + hw + (2 * c + 2) * 4,
        ),
    )(x, params)

    # Contiguous metadata-only reshape to the module's (1, 1, size, size).
    return out.reshape(1, 1, size, size)


def _init_params(key, n_channels=N_CHANNELS):
    """Deterministic parameter init (synthetic weights, no checkpoint)."""
    k1, k2, k3, k4 = jax.random.split(key, 4)
    wm = jax.random.normal(k1, (n_channels, 1), jnp.float32) * 0.5   # 1x1 conv W
    bm = jax.random.normal(k2, (1,), jnp.float32) * 0.1              # conv bias
    wd = jax.random.normal(k3, (n_channels, 1), jnp.float32) * 0.5   # disc W
    bd = jax.random.normal(k4, (1,), jnp.float32) * 0.1              # disc bias
    return wm, bm, wd, bd


if __name__ == "__main__":
    key = jax.random.PRNGKey(0)
    kx, kp = jax.random.split(key)

    # Input consistent with the module's assert: (1, n_channels, size, size).
    x = jax.random.normal(kx, (1, N_CHANNELS, SIZE, SIZE), jnp.float32)
    wm, bm, wd, bd = _init_params(kp)
    params = pack_params(wm, bm, wd, bd)   # once, outside the per-call path

    pred = water_pixel_detector(x, params)
    pred = jax.block_until_ready(pred)

    assert pred.shape == (1, 1, SIZE, SIZE)
    assert pred.dtype == jnp.uint8

    # Sanity check against a pure-JAX reference of the same forward.
    xr = x.reshape(N_CHANNELS, SIZE * SIZE)
    logits_ref = jnp.sum(xr * wm, axis=0) + bm[0]                      # (HW,)
    wet_logit_ref = jnp.sum(jnp.mean(xr, axis=1) * wd[:, 0]) + bd[0]   # scalar
    pred_ref = jnp.where(
        jnp.logical_and(jax.nn.sigmoid(logits_ref) > 0.5,
                        jax.nn.sigmoid(wet_logit_ref) > 0.5),
        1, 0).astype(jnp.uint8).reshape(1, 1, SIZE, SIZE)

    # Allow disagreement only where a logit sits numerically on the boundary
    # (per-pixel logits OR the global wet logit).
    near_zero = (jnp.abs(logits_ref) < 1e-5).reshape(1, 1, SIZE, SIZE)
    wet_near_zero = bool(jnp.abs(wet_logit_ref) < 1e-4)
    assert wet_near_zero or bool(jnp.all((pred == pred_ref) | near_zero)), \
        "mismatch vs reference"

    print("KERNEL_OK")
</pallas_src>

<mosaic_0001>
module attributes {stable_mosaic.version = 11 : i64} {
  func.func @_water_kernel(%arg0: memref<5x32x128xf32, #tpu.memory_space<vmem>>, %arg1: memref<12xf32, #tpu.memory_space<smem>>, %arg2: memref<32x128xi8, #tpu.memory_space<vmem>>) attributes {dimension_semantics = [], scalar_prefetch = 0 : i64, scratch_operands = 0 : i64, tpu.core_type = #tpu.core_type<tc>} {
    %c0 = arith.constant 0 : index
    %c0_0 = arith.constant 0 : index
    %c0_1 = arith.constant 0 : index
    %0 = vector.load %arg0[%c0, %c0_0, %c0_1] : memref<5x32x128xf32, #tpu.memory_space<vmem>>, vector<1x32x128xf32>
    %1 = vector.shape_cast %0 : vector<1x32x128xf32> to vector<32x128xf32>
    %c0_2 = arith.constant 0 : index
    %2 = memref.load %arg1[%c0_2] : memref<12xf32, #tpu.memory_space<smem>>
    %3 = vector.broadcast %2 : f32 to vector<32x128xf32>
    %4 = arith.mulf %1, %3 : vector<32x128xf32>
    %c5 = arith.constant 5 : index
    %5 = memref.load %arg1[%c5] : memref<12xf32, #tpu.memory_space<smem>>
    %6 = vector.broadcast %5 : f32 to vector<32x128xf32>
    %7 = arith.mulf %1, %6 : vector<32x128xf32>
    %c1 = arith.constant 1 : index
    %c0_3 = arith.constant 0 : index
    %c0_4 = arith.constant 0 : index
    %8 = vector.load %arg0[%c1, %c0_3, %c0_4] : memref<5x32x128xf32, #tpu.memory_space<vmem>>, vector<1x32x128xf32>
    %9 = vector.shape_cast %8 : vector<1x32x128xf32> to vector<32x128xf32>
    %c1_5 = arith.constant 1 : index
    %10 = memref.load %arg1[%c1_5] : memref<12xf32, #tpu.memory_space<smem>>
    %11 = vector.broadcast %10 : f32 to vector<32x128xf32>
    %12 = arith.mulf %9, %11 : vector<32x128xf32>
    %13 = arith.addf %4, %12 : vector<32x128xf32>
    %c6 = arith.constant 6 : index
    %14 = memref.load %arg1[%c6] : memref<12xf32, #tpu.memory_space<smem>>
    %15 = vector.broadcast %14 : f32 to vector<32x128xf32>
    %16 = arith.mulf %9, %15 : vector<32x128xf32>
    %17 = arith.addf %7, %16 : vector<32x128xf32>
    %c2 = arith.constant 2 : index
    %c0_6 = arith.constant 0 : index
    %c0_7 = arith.constant 0 : index
    %18 = vector.load %arg0[%c2, %c0_6, %c0_7] : memref<5x32x128xf32, #tpu.memory_space<vmem>>, vector<1x32x128xf32>
    %19 = vector.shape_cast %18 : vector<1x32x128xf32> to vector<32x128xf32>
    %c2_8 = arith.constant 2 : index
    %20 = memref.load %arg1[%c2_8] : memref<12xf32, #tpu.memory_space<smem>>
    %21 = vector.broadcast %20 : f32 to vector<32x128xf32>
    %22 = arith.mulf %19, %21 : vector<32x128xf32>
    %23 = arith.addf %13, %22 : vector<32x128xf32>
    %c7 = arith.constant 7 : index
    %24 = memref.load %arg1[%c7] : memref<12xf32, #tpu.memory_space<smem>>
    %25 = vector.broadcast %24 : f32 to vector<32x128xf32>
    %26 = arith.mulf %19, %25 : vector<32x128xf32>
    %27 = arith.addf %17, %26 : vector<32x128xf32>
    %c3 = arith.constant 3 : index
    %c0_9 = arith.constant 0 : index
    %c0_10 = arith.constant 0 : index
    %28 = vector.load %arg0[%c3, %c0_9, %c0_10] : memref<5x32x128xf32, #tpu.memory_space<vmem>>, vector<1x32x128xf32>
    %29 = vector.shape_cast %28 : vector<1x32x128xf32> to vector<32x128xf32>
    %c3_11 = arith.constant 3 : index
    %30 = memref.load %arg1[%c3_11] : memref<12xf32, #tpu.memory_space<smem>>
    %31 = vector.broadcast %30 : f32 to vector<32x128xf32>
    %32 = arith.mulf %29, %31 : vector<32x128xf32>
    %33 = arith.addf %23, %32 : vector<32x128xf32>
    %c8 = arith.constant 8 : index
    %34 = memref.load %arg1[%c8] : memref<12xf32, #tpu.memory_space<smem>>
    %35 = vector.broadcast %34 : f32 to vector<32x128xf32>
    %36 = arith.mulf %29, %35 : vector<32x128xf32>
    %37 = arith.addf %27, %36 : vector<32x128xf32>
    %c4 = arith.constant 4 : index
    %c0_12 = arith.constant 0 : index
    %c0_13 = arith.constant 0 : index
    %38 = vector.load %arg0[%c4, %c0_12, %c0_13] : memref<5x32x128xf32, #tpu.memory_space<vmem>>, vector<1x32x128xf32>
    %39 = vector.shape_cast %38 : vector<1x32x128xf32> to vector<32x128xf32>
    %c4_14 = arith.constant 4 : index
    %40 = memref.load %arg1[%c4_14] : memref<12xf32, #tpu.memory_space<smem>>
    %41 = vector.broadcast %40 : f32 to vector<32x128xf32>
    %42 = arith.mulf %39, %41 : vector<32x128xf32>
    %43 = arith.addf %33, %42 : vector<32x128xf32>
    %c9 = arith.constant 9 : index
    %44 = memref.load %arg1[%c9] : memref<12xf32, #tpu.memory_space<smem>>
    %45 = vector.broadcast %44 : f32 to vector<32x128xf32>
    %46 = arith.mulf %39, %45 : vector<32x128xf32>
    %47 = arith.addf %37, %46 : vector<32x128xf32>
    %c10 = arith.constant 10 : index
    %48 = memref.load %arg1[%c10] : memref<12xf32, #tpu.memory_space<smem>>
    %49 = vector.broadcast %48 : f32 to vector<32x128xf32>
    %50 = arith.addf %43, %49 : vector<32x128xf32>
    %51 = vector.shape_cast %47 : vector<32x128xf32> to vector<1x32x128xf32>
    %cst = arith.constant dense<0.000000e+00> : vector<1xf32>
    %52 = vector.multi_reduction <add>, %51, %cst [1, 2] : vector<1x32x128xf32> to vector<1xf32>
    %53 = vector.shape_cast %52 : vector<1xf32> to vector<1x1x1xf32>
    %54 = vector.extract %53[0, 0, 0] : f32 from vector<1x1x1xf32>
    %cst_15 = arith.constant 2.44140625E-4 : f32
    %55 = arith.mulf %54, %cst_15 : f32
    %c11 = arith.constant 11 : index
    %56 = memref.load %arg1[%c11] : memref<12xf32, #tpu.memory_space<smem>>
    %57 = arith.addf %55, %56 : f32
    %cst_16 = arith.constant 0.000000e+00 : f32
    %58 = vector.broadcast %cst_16 : f32 to vector<32x128xf32>
    %59 = arith.cmpf ogt, %50, %58 : vector<32x128xf32>
    %cst_17 = arith.constant 0.000000e+00 : f32
    %60 = arith.cmpf ogt, %57, %cst_17 : f32
    %61 = vector.broadcast %60 : i1 to vector<32x128xi1>
    %62 = arith.andi %59, %61 : vector<32x128xi1>
    %63 = arith.extui %62 : vector<32x128xi1> to vector<32x128xi8>
    %c0_18 = arith.constant 0 : index
    %c0_19 = arith.constant 0 : index
    %64 = vector.load %arg2[%c0_18, %c0_19] : memref<32x128xi8, #tpu.memory_space<vmem>>, vector<32x128xi8>
    tpu.vector_store %arg2[%c0_18, %c0_19], %63 {strides = array<i32>} : memref<32x128xi8, #tpu.memory_space<vmem>>, vector<32x128xi8>,
    return
  }
}

</mosaic_0001>

<llo_original>
// kernel: water_pixel_detector.1
$region0: #{water_pixel_detector.1}
  #allocation0 [shape = 'u32[]', space=smem, size = 0x4, offset = 0x4, fixed_abs, tag = 'smem constant byte address 0x4 - core index']
  #allocation1 [shape = 'u32[144,128]{1,0:T(1,128)}', space=vmem, size = 0x12000, scoped, tag = 'internal scratch']
  %s0 = inlined_call_operand.vmem [shape: f32[5,32,128], index: 0, kind: input, shape index: {}]
  %s1 = inlined_call_operand.vmem [shape: f32[12], index: 1, kind: input, shape index: {}]
  %s2 = inlined_call_operand.vmem [shape: u8[32,128], index: 2, kind: output, shape index: {}]
  %s3 = sld [smem:[#allocation0]]
  $region22: #{water_pixel_detector.1} parent=0
    _
  %s5 = ssub.s32 1, %s3
  %s6 = scalar_select 0, %s5, %s3
  $region1: #{water_pixel_detector.1} parent=0
    #allocation2 [shape = 'u8[512]{0}', space=smem, size = 0x200, scoped, tag = 'input window, operand 1, single buffered']
    #allocation3 [shape = 's32[1]{0}', space=sflag, size = 0x4, scoped, tag = 'scoped memory for water_pixel_detector.1']
    %7 = vsyncpa [#allocation3], 0
    // Predicated region
    $region2: #{water_pixel_detector.1} parent=1 // pred_check
      _
    $region3: #{water_pixel_detector.1} parent=1 // pred_check_branch
      %9 = sbr.rel (0) target = $region5
    $region4: #{water_pixel_detector.1} parent=1 // pred_region
      _
    $region5: #{water_pixel_detector.1} parent=1 // pred_fallthru
      _
    // Predicated region
    $region6: #{water_pixel_detector.1} parent=1 // pred_check
      _
    $region7: #{water_pixel_detector.1} parent=1 // pred_check_branch
      %11 = sbr.rel (0) target = $region9
    $region8: #{water_pixel_detector.1} parent=1 // pred_region
      %s13 = ssub.s32 16, 16
      %14 = vsyncadd [#allocation3], %s13
      %s16 = sshll.u32 %s1, 4
      %s17 = int_to_ptr.vmem [resolvable:$true] %s16
      %19 = dma.vmem_to_smem %s17, 16, [#allocation2], [#allocation3]
    $region9: #{water_pixel_detector.1} parent=1 // pred_fallthru
      _
    // Predicated region
    $region10: #{water_pixel_detector.1} parent=1 // pred_check
      _
    $region11: #{water_pixel_detector.1} parent=1 // pred_check_branch
      %21 = sbr.rel (0) target = $region13
    $region12: #{water_pixel_detector.1} parent=1 // pred_region
      %22 = dma.done [#allocation3], 16
    $region13: #{water_pixel_detector.1} parent=1 // pred_fallthru
      _
    %23 = sfence
    %v26 = vld [vmem:[%s0] sm:$0xff]
    %v27 = vld [vmem:[%s0 + $0x8] sm:$0xff]
    %v28 = vld [vmem:[%s0 + $0x10] sm:$0xff]
    %v29 = vld [vmem:[%s0 + $0x18] sm:$0xff]
    %s30 = sld [smem:[#allocation2]]
    %v31 = vstv %s30
    %v32 = vmul.f32 %v26, %v31
    %v33 = vmul.f32 %v27, %v31
    %v34 = vmul.f32 %v28, %v31
    %v35 = vmul.f32 %v29, %v31
    %s36 = sld [smem:[#allocation2 + $0x5]]
    %v37 = vstv %s36
    %v38 = vmul.f32 %v26, %v37
    %v39 = vmul.f32 %v27, %v37
    %v40 = vmul.f32 %v28, %v37
    %v41 = vmul.f32 %v29, %v37
    %s42 = scalar_lea.vmem %s0, 32
    %v43 = vld [vmem:[%s42] sm:$0xff]
    %v44 = vld [vmem:[%s42 + $0x8] sm:$0xff]
    %v45 = vld [vmem:[%s42 + $0x10] sm:$0xff]
    %v46 = vld [vmem:[%s42 + $0x18] sm:$0xff]
    %s47 = sld [smem:[#allocation2 + $0x1]]
    %v48 = vstv %s47
    %v49 = vmul.f32 %v43, %v48
    %v50 = vmul.f32 %v44, %v48
    %v51 = vmul.f32 %v45, %v48
    %v52 = vmul.f32 %v46, %v48
    %v53 = vadd.f32 %v32, %v49
    %v54 = vadd.f32 %v33, %v50
    %v55 = vadd.f32 %v34, %v51
    %v56 = vadd.f32 %v35, %v52
    %s57 = sld [smem:[#allocation2 + $0x6]]
    %v58 = vstv %s57
    %v59 = vmul.f32 %v43, %v58
    %v60 = vmul.f32 %v44, %v58
    %v61 = vmul.f32 %v45, %v58
    %v62 = vmul.f32 %v46, %v58
    %v63 = vadd.f32 %v38, %v59
    %v64 = vadd.f32 %v39, %v60
    %v65 = vadd.f32 %v40, %v61
    %v66 = vadd.f32 %v41, %v62
    %s67 = scalar_lea.vmem %s0, 64
    %v68 = vld [vmem:[%s67] sm:$0xff]
    %v69 = vld [vmem:[%s67 + $0x8] sm:$0xff]
    %v70 = vld [vmem:[%s67 + $0x10] sm:$0xff]
    %v71 = vld [vmem:[%s67 + $0x18] sm:$0xff]
    %s72 = sld [smem:[#allocation2 + $0x2]]
    %v73 = vstv %s72
    %v74 = vmul.f32 %v68, %v73
    %v75 = vmul.f32 %v69, %v73
    %v76 = vmul.f32 %v70, %v73
    %v77 = vmul.f32 %v71, %v73
    %v78 = vadd.f32 %v53, %v74
    %v79 = vadd.f32 %v54, %v75
    %v80 = vadd.f32 %v55, %v76
    %v81 = vadd.f32 %v56, %v77
    %s82 = sld [smem:[#allocation2 + $0x7]]
    %v83 = vstv %s82
    %v84 = vmul.f32 %v68, %v83
    %v85 = vmul.f32 %v69, %v83
    %v86 = vmul.f32 %v70, %v83
    %v87 = vmul.f32 %v71, %v83
    %v88 = vadd.f32 %v63, %v84
    %v89 = vadd.f32 %v64, %v85
    %v90 = vadd.f32 %v65, %v86
    %v91 = vadd.f32 %v66, %v87
    %s92 = scalar_lea.vmem %s0, 96
    %v93 = vld [vmem:[%s92] sm:$0xff]
    %v94 = vld [vmem:[%s92 + $0x8] sm:$0xff]
    %v95 = vld [vmem:[%s92 + $0x10] sm:$0xff]
    %v96 = vld [vmem:[%s92 + $0x18] sm:$0xff]
    %s97 = sld [smem:[#allocation2 + $0x3]]
    %v98 = vstv %s97
    %v99 = vmul.f32 %v93, %v98
    %v100 = vmul.f32 %v94, %v98
    %v101 = vmul.f32 %v95, %v98
    %v102 = vmul.f32 %v96, %v98
    %v103 = vadd.f32 %v78, %v99
    %v104 = vadd.f32 %v79, %v100
    %v105 = vadd.f32 %v80, %v101
    %v106 = vadd.f32 %v81, %v102
    %s107 = sld [smem:[#allocation2 + $0x8]]
    %v108 = vstv %s107
    %v109 = vmul.f32 %v93, %v108
    %v110 = vmul.f32 %v94, %v108
    %v111 = vmul.f32 %v95, %v108
    %v112 = vmul.f32 %v96, %v108
    %v113 = vadd.f32 %v88, %v109
    %v114 = vadd.f32 %v89, %v110
    %v115 = vadd.f32 %v90, %v111
    %v116 = vadd.f32 %v91, %v112
    %s117 = scalar_lea.vmem %s0, 128
    %v118 = vld [vmem:[%s117] sm:$0xff]
    %v119 = vld [vmem:[%s117 + $0x8] sm:$0xff]
    %v120 = vld [vmem:[%s117 + $0x10] sm:$0xff]
    %v121 = vld [vmem:[%s117 + $0x18] sm:$0xff]
    %s122 = sld [smem:[#allocation2 + $0x4]]
    %v123 = vstv %s122
    %v124 = vmul.f32 %v118, %v123
    %v125 = vmul.f32 %v119, %v123
    %v126 = vmul.f32 %v120, %v123
    %v127 = vmul.f32 %v121, %v123
    %v128 = vadd.f32 %v103, %v124
    %v129 = vadd.f32 %v104, %v125
    %v130 = vadd.f32 %v105, %v126
    %v131 = vadd.f32 %v106, %v127
    %s132 = sld [smem:[#allocation2 + $0x9]]
    %v133 = vstv %s132
    %v134 = vmul.f32 %v118, %v133
    %v135 = vmul.f32 %v119, %v133
    %v136 = vmul.f32 %v120, %v133
    %v137 = vmul.f32 %v121, %v133
    %v138 = vadd.f32 %v113, %v134
    %v139 = vadd.f32 %v114, %v135
    %v140 = vadd.f32 %v115, %v136
    %v141 = vadd.f32 %v116, %v137
    %s142 = sld [smem:[#allocation2 + $0xa]]
    %v143 = vstv %s142
    %v144 = vadd.f32 %v128, %v143
    %v145 = vadd.f32 %v129, %v143
    %v146 = vadd.f32 %v130, %v143
    %v147 = vadd.f32 %v131, %v143
    %v148 = vadd.f32 %v138, %v139
    %v149 = vadd.f32 %v148, %v140
    %v150 = vadd.f32 %v149, %v141
    %151 = vadd.xlane.f32.xlu0 %v150
    %v152 = vpop.xlane.xlu0 %151
    %v153 = vrot.slane %v152, 4
    %v154 = vadd.f32 %v152, %v153
    %v155 = vrot.slane %v154, 2
    %v156 = vadd.f32 %v154, %v155
    %v157 = vrot.slane %v156, 1
    %v158 = vadd.f32 %v156, %v157
    %s159 = vtos %v158
    %s160 = smul.f32 %s159, 0.00024414063
    %s161 = sld [smem:[#allocation2 + $0xb]]
    %s162 = sadd.f32 %s160, %s161
    %vm163 = vcmp.gt.f32.partialorder %v144, 0.0
    %vm164 = vcmp.gt.f32.partialorder %v145, 0.0
    %vm165 = vcmp.gt.f32.partialorder %v146, 0.0
    %vm166 = vcmp.gt.f32.partialorder %v147, 0.0
    %p167 = scmp.gt.f32.partialorder %s162, 0.0
    %s168 = scalar_select %p167, 1, 0
    %v169 = vstv %s168
    %vm170 = vcmp.eq.s32.totalorder %v169, 1
    %vm171 = vmand %vm163, %vm170
    %vm172 = vmand %vm164, %vm170
    %vm173 = vmand %vm165, %vm170
    %vm174 = vmand %vm166, %vm170
    %vm175 = vmpackc.low %vm172, %vm171
    %vm176 = vmpackc.low %vm174, %vm173
    %vm177 = vmpackc.even %vm176, %vm175
    %v178 = vsel %vm177, 16843009, 0
    %179 = vst [vmem:[%s2] sm:$0xff] %v178
    // Predicated region
    $region14: #{water_pixel_detector.1} parent=1 // pred_check
      _
    $region15: #{water_pixel_detector.1} parent=1 // pred_check_branch
      %181 = sbr.rel (0) target = $region17
    $region16: #{water_pixel_detector.1} parent=1 // pred_region
      _
    $region17: #{water_pixel_detector.1} parent=1 // pred_fallthru
      _
    // Predicated region
    $region18: #{water_pixel_detector.1} parent=1 // pred_check
      _
    $region19: #{water_pixel_detector.1} parent=1 // pred_check_branch
      %183 = sbr.rel (0) target = $region21
    $region20: #{water_pixel_detector.1} parent=1 // pred_region
      _
    $region21: #{water_pixel_detector.1} parent=1 // pred_fallthru
      _
    %184 = vsyncpa [#allocation3], 1

</llo_original>
